<compile_context>
chip_gen: v7x
topology: tpu7x:2x2x1
jax: 0.10.0
libtpu: 0.0.40
codegen_flags: <defaults>
</compile_context>

<pallas_src>
import functools

import jax
import jax.numpy as jnp
import numpy as np
from jax.experimental import pallas as pl
from jax.experimental.pallas import tpu as pltpu

EPS = 1e-12


# ---------------------------------------------------------------- fused kernel
def _liaa_iaa_kernel(A_ref, At_ref, Xt_ref, Wt_ref, gb_ref, p_ref, scal_ref,
                     out_ref, *, n_iters):
    """n_iters fused (weight-tied) IAA layer updates.

    Shapes (float32, lane-major vectors):
      A    : (M, L)   steering dictionary (sensors x grid)
      At   : (L, M)   A pre-transposed (MXU-native R matmul)
      Xt   : (T, M)   snapshots, pre-transposed
      Wt   : (L, L)   gate weight pre-transposed (gate = u @ Wt + b)
      gb   : (1, L)   gate bias
      p    : (1, L)   initial power estimate (lane-dense row)
      scal : (3,)     SMEM: [ridge, sigmoid(delta), lmbda]
      out  : (1, L)
    """
    A = A_ref[...]                        # (M, L)
    At = At_ref[...]                      # (L, M)
    Xt = Xt_ref[...]                      # (T, M)
    Wt = Wt_ref[...]                      # (L, L)
    gb = gb_ref[...]                      # (1, L)
    m = A.shape[0]

    ridge = scal_ref[0]
    delta = scal_ref[1]                   # already sigmoid-constrained
    lmbda = scal_ref[2]

    # In-kernel identity (replaces the old `eye` DMA); constant after lowering.
    rows = jax.lax.broadcasted_iota(jnp.int32, (m, m), 0)
    cols = jax.lax.broadcasted_iota(jnp.int32, (m, m), 1)
    eye = (rows == cols).astype(jnp.float32)
    ridge_eye = ridge * eye

    p = p_ref[...]                        # (1, L)  carried across layers

    for _ in range(n_iters):              # static unroll over fused layers
        # R = A diag(p) A^T + ridge * I   (plain MXU matmul vs pre-transposed At)
        AP = A * p                                                     # (M, L)
        R = jnp.dot(AP, At, preferred_element_type=jnp.float32) + ridge_eye

        # Solve R @ B = A  =>  B = R^{-1} A.  Unrolled Gauss-Jordan (R is SPD
        # thanks to the ridge, no pivoting).  Pure in-VMEM VPU/EUP work.
        Rk, Bk = R, A
        for k in range(m):                # static unroll, m == 8
            piv = Rk[k:k + 1, k:k + 1]                        # (1, 1)
            r0 = pl.reciprocal(piv, approx=True)              # EUP vrcp
            rinv = r0 * (2.0 - piv * r0)                      # 1 Newton step
            r_row = Rk[k:k + 1, :] * rinv                     # (1, M)
            brow = Bk[k:k + 1, :] * rinv                      # (1, L)
            f = Rk[:, k:k + 1] - eye[:, k:k + 1]              # (M, 1)
            Rk = Rk - f * r_row                               # col k -> e_k
            Bk = Bk - f * brow
        B = Bk                                                # (M, L) = R^{-1} A

        # S^T = X^T B: sublane-axis reductions keep q/d/v lane-dense (1, L).
        St = jnp.dot(Xt, B, preferred_element_type=jnp.float32)        # (T, L)
        q = jnp.sum(St * St, axis=0, keepdims=True)           # (1, L)
        d = jnp.sum(A * B, axis=0, keepdims=True)             # (1, L)
        dd = d + EPS
        i0 = pl.reciprocal(dd, approx=True)                   # EUP vrcp
        inv_d = i0 * (2.0 - dd * i0)                          # 1 Newton step
        v = q * inv_d

        u = p + delta * (v - p)                               # use_residual

        # gate: g = sigmoid(W @ u + b) == sigmoid(u_row @ W^T + b_row)
        g = jax.nn.sigmoid(
            jnp.dot(u, Wt, preferred_element_type=jnp.float32) + gb)
        r = g * v + (1.0 - g) * p                             # use_gating
        p = jnp.maximum(r - lmbda, 0.0)                       # shrinkage + relu

    out_ref[...] = p


# ---------------------------------------------------------------- wrapper
def liaa_iaa_forward(gamma, A, X, params, cfg, n_iters=1):
    """Apply the IAA layer update `n_iters` times (weight-tied) in one kernel."""
    M, L = A.shape
    vmem = pl.BlockSpec(memory_space=pltpu.MemorySpace.VMEM)
    smem = pl.BlockSpec(memory_space=pltpu.MemorySpace.SMEM)

    A = A.astype(jnp.float32)
    At = A.T                                           # (L, M) once per call
    Xt = X.T.astype(jnp.float32)                       # (T, M) once per call
    Wt = params['gate_W'].T.astype(jnp.float32)        # (L, L) once per call
    gb = params['gate_b'].reshape(1, L).astype(jnp.float32)
    p_row = gamma.reshape(1, L).astype(jnp.float32)
    # constrain_gamma=True => delta = sigmoid(raw); folded into the scalar pack.
    scal = jnp.stack([jnp.float32(cfg['ridge_reg']),
                      jax.nn.sigmoid(params['delta']).astype(jnp.float32),
                      params['lmbda'].astype(jnp.float32)])

    out = pl.pallas_call(
        functools.partial(_liaa_iaa_kernel, n_iters=n_iters),
        out_shape=jax.ShapeDtypeStruct((1, L), jnp.float32),
        in_specs=[vmem, vmem, vmem, vmem, vmem, vmem, smem],
        out_specs=vmem,
    )(A, At, Xt, Wt, gb, p_row, scal)

    return out.reshape(L)


# ---------------------------------------------------------------- pure-JAX reference
def liaa_iaa_reference(gamma, A, X, params, cfg):
    with jax.default_matmul_precision('highest'):
        P = jnp.diag(gamma)
        R = A @ P @ A.T + cfg['ridge_reg'] * jnp.eye(A.shape[0], dtype=A.dtype)
        Rinv = jnp.linalg.inv(R)
        ARi = A.T @ Rinv
        S = ARi @ X
        q = jnp.sum(jnp.abs(S) ** 2, axis=1)
        d = jnp.sum(ARi * A.T, axis=1)
        v = q / (d + EPS)
        delta = jax.nn.sigmoid(params['delta'])
        u = gamma + delta * (v - gamma)
        g = jax.nn.sigmoid(params['gate_W'] @ u + params['gate_b'])
        r = g * v + (1.0 - g) * gamma
        return jnp.maximum(r - params['lmbda'], 0.0)


if __name__ == "__main__":
    cfg = dict(
        algorithm='IAA', L=32,
        use_ridge=True, ridge_reg=1e-3,
        constrain_gamma=True, use_residual=True,
        use_gating=True, use_shrinkage=True,
        use_layernorm=False, use_attention=False,
        delta_init=0.5, lmbda_init=0.01,
    )
    M, L, T = 8, cfg['L'], 16
    N_LAYERS = 4                      # unfolded, weight-tied layers fused in one call

    key = jax.random.PRNGKey(0)
    k_a, k_x, k_g, k_w, k_b = jax.random.split(key, 5)
    A = jax.random.normal(k_a, (M, L), dtype=jnp.float32)
    X = jax.random.normal(k_x, (M, T), dtype=jnp.float32)
    gamma = jax.random.uniform(k_g, (L,), dtype=jnp.float32, minval=0.5, maxval=1.5)

    params = {
        'gate_W': jax.random.normal(k_w, (L, L), dtype=jnp.float32) * (1.0 / np.sqrt(L)),
        'gate_b': jax.random.normal(k_b, (L,), dtype=jnp.float32) * 0.01,
        'delta': jnp.float32(cfg['delta_init']),
        'lmbda': jnp.float32(cfg['lmbda_init']),
    }

    fwd_single = jax.jit(functools.partial(liaa_iaa_forward, cfg=cfg, n_iters=1))
    fwd_fused = jax.jit(functools.partial(liaa_iaa_forward, cfg=cfg, n_iters=N_LAYERS))

    # ---- single layer (exact module forward semantics) ----
    out1 = jax.block_until_ready(fwd_single(gamma, A, X, params))
    ref1 = jax.block_until_ready(liaa_iaa_reference(gamma, A, X, params, cfg))
    np.testing.assert_allclose(np.asarray(out1), np.asarray(ref1),
                               rtol=1e-3, atol=1e-4)

    # ---- fused unfolded network: N weight-tied layers in ONE pallas_call ----
    outN = jax.block_until_ready(fwd_fused(gamma, A, X, params))
    refN = gamma
    for _ in range(N_LAYERS):
        refN = liaa_iaa_reference(refN, A, X, params, cfg)
    refN = jax.block_until_ready(refN)
    np.testing.assert_allclose(np.asarray(outN), np.asarray(refN),
                               rtol=2e-3, atol=2e-4)

    print("KERNEL_OK")
</pallas_src>

<mosaic_0001>
module attributes {stable_mosaic.version = 11 : i64} {
  func.func @_liaa_iaa_kernel(%arg0: memref<8x32xf32, #tpu.memory_space<vmem>>, %arg1: memref<32x8xf32, #tpu.memory_space<vmem>>, %arg2: memref<16x8xf32, #tpu.memory_space<vmem>>, %arg3: memref<32x32xf32, #tpu.memory_space<vmem>>, %arg4: memref<1x32xf32, #tpu.memory_space<vmem>>, %arg5: memref<1x32xf32, #tpu.memory_space<vmem>>, %arg6: memref<3xf32, #tpu.memory_space<smem>>, %arg7: memref<1x32xf32, #tpu.memory_space<vmem>>) attributes {dimension_semantics = [], scalar_prefetch = 0 : i64, scratch_operands = 0 : i64, tpu.core_type = #tpu.core_type<tc>} {
    %c0 = arith.constant 0 : index
    %c0_0 = arith.constant 0 : index
    %0 = vector.load %arg0[%c0, %c0_0] : memref<8x32xf32, #tpu.memory_space<vmem>>, vector<8x32xf32>
    %c0_1 = arith.constant 0 : index
    %c0_2 = arith.constant 0 : index
    %1 = vector.load %arg1[%c0_1, %c0_2] : memref<32x8xf32, #tpu.memory_space<vmem>>, vector<32x8xf32>
    %c0_3 = arith.constant 0 : index
    %c0_4 = arith.constant 0 : index
    %2 = vector.load %arg2[%c0_3, %c0_4] : memref<16x8xf32, #tpu.memory_space<vmem>>, vector<16x8xf32>
    %c0_5 = arith.constant 0 : index
    %c0_6 = arith.constant 0 : index
    %3 = vector.load %arg3[%c0_5, %c0_6] : memref<32x32xf32, #tpu.memory_space<vmem>>, vector<32x32xf32>
    %c0_7 = arith.constant 0 : index
    %c0_8 = arith.constant 0 : index
    %4 = vector.load %arg4[%c0_7, %c0_8] : memref<1x32xf32, #tpu.memory_space<vmem>>, vector<1x32xf32>
    %c0_9 = arith.constant 0 : index
    %5 = memref.load %arg6[%c0_9] : memref<3xf32, #tpu.memory_space<smem>>
    %c1 = arith.constant 1 : index
    %6 = memref.load %arg6[%c1] : memref<3xf32, #tpu.memory_space<smem>>
    %c2 = arith.constant 2 : index
    %7 = memref.load %arg6[%c2] : memref<3xf32, #tpu.memory_space<smem>>
    %8 = tpu.iota {dimensions = array<i32: 0>} : vector<8x8xi32>
    %9 = tpu.iota {dimensions = array<i32: 1>} : vector<8x8xi32>
    %10 = arith.cmpi eq, %8, %9 : vector<8x8xi32>
    %11 = arith.extui %10 : vector<8x8xi1> to vector<8x8xi32>
    %12 = arith.sitofp %11 : vector<8x8xi32> to vector<8x8xf32>
    %13 = vector.broadcast %5 : f32 to vector<8x8xf32>
    %14 = arith.mulf %13, %12 : vector<8x8xf32>
    %c0_10 = arith.constant 0 : index
    %c0_11 = arith.constant 0 : index
    %15 = vector.load %arg5[%c0_10, %c0_11] : memref<1x32xf32, #tpu.memory_space<vmem>>, vector<1x32xf32>
    %16 = vector.broadcast %15 : vector<1x32xf32> to vector<8x32xf32>
    %17 = arith.mulf %0, %16 : vector<8x32xf32>
    %cst = arith.constant dense<0.000000e+00> : vector<8x8xf32>
    %18 = tpu.matmul %17, %1, %cst {dimension_numbers = #tpu.dot_dimension_numbers<[1], [0], [0], [1], [0, 0, 1, 1], [], []>} : vector<8x32xf32>, vector<32x8xf32>, vector<8x8xf32> -> vector<8x8xf32>
    %19 = arith.addf %18, %14 : vector<8x8xf32>
    %20 = vector.extract_strided_slice %19 {offsets = [0, 0], sizes = [1, 1], strides = [1, 1]} : vector<8x8xf32> to vector<1x1xf32>
    %21 = tpu.reciprocal %20 {approx = true} : vector<1x1xf32> -> vector<1x1xf32>
    %22 = arith.mulf %20, %21 : vector<1x1xf32>
    %cst_12 = arith.constant 2.000000e+00 : f32
    %23 = vector.broadcast %cst_12 : f32 to vector<1x1xf32>
    %24 = arith.subf %23, %22 : vector<1x1xf32>
    %25 = arith.mulf %21, %24 : vector<1x1xf32>
    %26 = vector.extract_strided_slice %19 {offsets = [0, 0], sizes = [1, 8], strides = [1, 1]} : vector<8x8xf32> to vector<1x8xf32>
    %27 = vector.broadcast %25 : vector<1x1xf32> to vector<1x8xf32>
    %28 = arith.mulf %26, %27 : vector<1x8xf32>
    %29 = vector.extract_strided_slice %0 {offsets = [0, 0], sizes = [1, 32], strides = [1, 1]} : vector<8x32xf32> to vector<1x32xf32>
    %30 = vector.broadcast %25 : vector<1x1xf32> to vector<1x32xf32>
    %31 = arith.mulf %29, %30 : vector<1x32xf32>
    %32 = vector.extract_strided_slice %19 {offsets = [0, 0], sizes = [8, 1], strides = [1, 1]} : vector<8x8xf32> to vector<8x1xf32>
    %33 = vector.extract_strided_slice %12 {offsets = [0, 0], sizes = [8, 1], strides = [1, 1]} : vector<8x8xf32> to vector<8x1xf32>
    %34 = arith.subf %32, %33 : vector<8x1xf32>
    %35 = vector.broadcast %34 : vector<8x1xf32> to vector<8x8xf32>
    %36 = vector.broadcast %28 : vector<1x8xf32> to vector<8x8xf32>
    %37 = arith.mulf %35, %36 : vector<8x8xf32>
    %38 = arith.subf %19, %37 : vector<8x8xf32>
    %39 = vector.broadcast %34 : vector<8x1xf32> to vector<8x32xf32>
    %40 = vector.broadcast %31 : vector<1x32xf32> to vector<8x32xf32>
    %41 = arith.mulf %39, %40 : vector<8x32xf32>
    %42 = arith.subf %0, %41 : vector<8x32xf32>
    %43 = vector.extract_strided_slice %38 {offsets = [1, 1], sizes = [1, 1], strides = [1, 1]} : vector<8x8xf32> to vector<1x1xf32>
    %44 = tpu.reciprocal %43 {approx = true} : vector<1x1xf32> -> vector<1x1xf32>
    %45 = arith.mulf %43, %44 : vector<1x1xf32>
    %cst_13 = arith.constant 2.000000e+00 : f32
    %46 = vector.broadcast %cst_13 : f32 to vector<1x1xf32>
    %47 = arith.subf %46, %45 : vector<1x1xf32>
    %48 = arith.mulf %44, %47 : vector<1x1xf32>
    %49 = vector.extract_strided_slice %38 {offsets = [1, 0], sizes = [1, 8], strides = [1, 1]} : vector<8x8xf32> to vector<1x8xf32>
    %50 = vector.broadcast %48 : vector<1x1xf32> to vector<1x8xf32>
    %51 = arith.mulf %49, %50 : vector<1x8xf32>
    %52 = vector.extract_strided_slice %42 {offsets = [1, 0], sizes = [1, 32], strides = [1, 1]} : vector<8x32xf32> to vector<1x32xf32>
    %53 = vector.broadcast %48 : vector<1x1xf32> to vector<1x32xf32>
    %54 = arith.mulf %52, %53 : vector<1x32xf32>
    %55 = vector.extract_strided_slice %38 {offsets = [0, 1], sizes = [8, 1], strides = [1, 1]} : vector<8x8xf32> to vector<8x1xf32>
    %56 = vector.extract_strided_slice %12 {offsets = [0, 1], sizes = [8, 1], strides = [1, 1]} : vector<8x8xf32> to vector<8x1xf32>
    %57 = arith.subf %55, %56 : vector<8x1xf32>
    %58 = vector.broadcast %57 : vector<8x1xf32> to vector<8x8xf32>
    %59 = vector.broadcast %51 : vector<1x8xf32> to vector<8x8xf32>
    %60 = arith.mulf %58, %59 : vector<8x8xf32>
    %61 = arith.subf %38, %60 : vector<8x8xf32>
    %62 = vector.broadcast %57 : vector<8x1xf32> to vector<8x32xf32>
    %63 = vector.broadcast %54 : vector<1x32xf32> to vector<8x32xf32>
    %64 = arith.mulf %62, %63 : vector<8x32xf32>
    %65 = arith.subf %42, %64 : vector<8x32xf32>
    %66 = vector.extract_strided_slice %61 {offsets = [2, 2], sizes = [1, 1], strides = [1, 1]} : vector<8x8xf32> to vector<1x1xf32>
    %67 = tpu.reciprocal %66 {approx = true} : vector<1x1xf32> -> vector<1x1xf32>
    %68 = arith.mulf %66, %67 : vector<1x1xf32>
    %cst_14 = arith.constant 2.000000e+00 : f32
    %69 = vector.broadcast %cst_14 : f32 to vector<1x1xf32>
    %70 = arith.subf %69, %68 : vector<1x1xf32>
    %71 = arith.mulf %67, %70 : vector<1x1xf32>
    %72 = vector.extract_strided_slice %61 {offsets = [2, 0], sizes = [1, 8], strides = [1, 1]} : vector<8x8xf32> to vector<1x8xf32>
    %73 = vector.broadcast %71 : vector<1x1xf32> to vector<1x8xf32>
    %74 = arith.mulf %72, %73 : vector<1x8xf32>
    %75 = vector.extract_strided_slice %65 {offsets = [2, 0], sizes = [1, 32], strides = [1, 1]} : vector<8x32xf32> to vector<1x32xf32>
    %76 = vector.broadcast %71 : vector<1x1xf32> to vector<1x32xf32>
    %77 = arith.mulf %75, %76 : vector<1x32xf32>
    %78 = vector.extract_strided_slice %61 {offsets = [0, 2], sizes = [8, 1], strides = [1, 1]} : vector<8x8xf32> to vector<8x1xf32>
    %79 = vector.extract_strided_slice %12 {offsets = [0, 2], sizes = [8, 1], strides = [1, 1]} : vector<8x8xf32> to vector<8x1xf32>
    %80 = arith.subf %78, %79 : vector<8x1xf32>
    %81 = vector.broadcast %80 : vector<8x1xf32> to vector<8x8xf32>
    %82 = vector.broadcast %74 : vector<1x8xf32> to vector<8x8xf32>
    %83 = arith.mulf %81, %82 : vector<8x8xf32>
    %84 = arith.subf %61, %83 : vector<8x8xf32>
    %85 = vector.broadcast %80 : vector<8x1xf32> to vector<8x32xf32>
    %86 = vector.broadcast %77 : vector<1x32xf32> to vector<8x32xf32>
    %87 = arith.mulf %85, %86 : vector<8x32xf32>
    %88 = arith.subf %65, %87 : vector<8x32xf32>
    %89 = vector.extract_strided_slice %84 {offsets = [3, 3], sizes = [1, 1], strides = [1, 1]} : vector<8x8xf32> to vector<1x1xf32>
    %90 = tpu.reciprocal %89 {approx = true} : vector<1x1xf32> -> vector<1x1xf32>
    %91 = arith.mulf %89, %90 : vector<1x1xf32>
    %cst_15 = arith.constant 2.000000e+00 : f32
    %92 = vector.broadcast %cst_15 : f32 to vector<1x1xf32>
    %93 = arith.subf %92, %91 : vector<1x1xf32>
    %94 = arith.mulf %90, %93 : vector<1x1xf32>
    %95 = vector.extract_strided_slice %84 {offsets = [3, 0], sizes = [1, 8], strides = [1, 1]} : vector<8x8xf32> to vector<1x8xf32>
    %96 = vector.broadcast %94 : vector<1x1xf32> to vector<1x8xf32>
    %97 = arith.mulf %95, %96 : vector<1x8xf32>
    %98 = vector.extract_strided_slice %88 {offsets = [3, 0], sizes = [1, 32], strides = [1, 1]} : vector<8x32xf32> to vector<1x32xf32>
    %99 = vector.broadcast %94 : vector<1x1xf32> to vector<1x32xf32>
    %100 = arith.mulf %98, %99 : vector<1x32xf32>
    %101 = vector.extract_strided_slice %84 {offsets = [0, 3], sizes = [8, 1], strides = [1, 1]} : vector<8x8xf32> to vector<8x1xf32>
    %102 = vector.extract_strided_slice %12 {offsets = [0, 3], sizes = [8, 1], strides = [1, 1]} : vector<8x8xf32> to vector<8x1xf32>
    %103 = arith.subf %101, %102 : vector<8x1xf32>
    %104 = vector.broadcast %103 : vector<8x1xf32> to vector<8x8xf32>
    %105 = vector.broadcast %97 : vector<1x8xf32> to vector<8x8xf32>
    %106 = arith.mulf %104, %105 : vector<8x8xf32>
    %107 = arith.subf %84, %106 : vector<8x8xf32>
    %108 = vector.broadcast %103 : vector<8x1xf32> to vector<8x32xf32>
    %109 = vector.broadcast %100 : vector<1x32xf32> to vector<8x32xf32>
    %110 = arith.mulf %108, %109 : vector<8x32xf32>
    %111 = arith.subf %88, %110 : vector<8x32xf32>
    %112 = vector.extract_strided_slice %107 {offsets = [4, 4], sizes = [1, 1], strides = [1, 1]} : vector<8x8xf32> to vector<1x1xf32>
    %113 = tpu.reciprocal %112 {approx = true} : vector<1x1xf32> -> vector<1x1xf32>
    %114 = arith.mulf %112, %113 : vector<1x1xf32>
    %cst_16 = arith.constant 2.000000e+00 : f32
    %115 = vector.broadcast %cst_16 : f32 to vector<1x1xf32>
    %116 = arith.subf %115, %114 : vector<1x1xf32>
    %117 = arith.mulf %113, %116 : vector<1x1xf32>
    %118 = vector.extract_strided_slice %107 {offsets = [4, 0], sizes = [1, 8], strides = [1, 1]} : vector<8x8xf32> to vector<1x8xf32>
    %119 = vector.broadcast %117 : vector<1x1xf32> to vector<1x8xf32>
    %120 = arith.mulf %118, %119 : vector<1x8xf32>
    %121 = vector.extract_strided_slice %111 {offsets = [4, 0], sizes = [1, 32], strides = [1, 1]} : vector<8x32xf32> to vector<1x32xf32>
    %122 = vector.broadcast %117 : vector<1x1xf32> to vector<1x32xf32>
    %123 = arith.mulf %121, %122 : vector<1x32xf32>
    %124 = vector.extract_strided_slice %107 {offsets = [0, 4], sizes = [8, 1], strides = [1, 1]} : vector<8x8xf32> to vector<8x1xf32>
    %125 = vector.extract_strided_slice %12 {offsets = [0, 4], sizes = [8, 1], strides = [1, 1]} : vector<8x8xf32> to vector<8x1xf32>
    %126 = arith.subf %124, %125 : vector<8x1xf32>
    %127 = vector.broadcast %126 : vector<8x1xf32> to vector<8x8xf32>
    %128 = vector.broadcast %120 : vector<1x8xf32> to vector<8x8xf32>
    %129 = arith.mulf %127, %128 : vector<8x8xf32>
    %130 = arith.subf %107, %129 : vector<8x8xf32>
    %131 = vector.broadcast %126 : vector<8x1xf32> to vector<8x32xf32>
    %132 = vector.broadcast %123 : vector<1x32xf32> to vector<8x32xf32>
    %133 = arith.mulf %131, %132 : vector<8x32xf32>
    %134 = arith.subf %111, %133 : vector<8x32xf32>
    %135 = vector.extract_strided_slice %130 {offsets = [5, 5], sizes = [1, 1], strides = [1, 1]} : vector<8x8xf32> to vector<1x1xf32>
    %136 = tpu.reciprocal %135 {approx = true} : vector<1x1xf32> -> vector<1x1xf32>
    %137 = arith.mulf %135, %136 : vector<1x1xf32>
    %cst_17 = arith.constant 2.000000e+00 : f32
    %138 = vector.broadcast %cst_17 : f32 to vector<1x1xf32>
    %139 = arith.subf %138, %137 : vector<1x1xf32>
    %140 = arith.mulf %136, %139 : vector<1x1xf32>
    %141 = vector.extract_strided_slice %130 {offsets = [5, 0], sizes = [1, 8], strides = [1, 1]} : vector<8x8xf32> to vector<1x8xf32>
    %142 = vector.broadcast %140 : vector<1x1xf32> to vector<1x8xf32>
    %143 = arith.mulf %141, %142 : vector<1x8xf32>
    %144 = vector.extract_strided_slice %134 {offsets = [5, 0], sizes = [1, 32], strides = [1, 1]} : vector<8x32xf32> to vector<1x32xf32>
    %145 = vector.broadcast %140 : vector<1x1xf32> to vector<1x32xf32>
    %146 = arith.mulf %144, %145 : vector<1x32xf32>
    %147 = vector.extract_strided_slice %130 {offsets = [0, 5], sizes = [8, 1], strides = [1, 1]} : vector<8x8xf32> to vector<8x1xf32>
    %148 = vector.extract_strided_slice %12 {offsets = [0, 5], sizes = [8, 1], strides = [1, 1]} : vector<8x8xf32> to vector<8x1xf32>
    %149 = arith.subf %147, %148 : vector<8x1xf32>
    %150 = vector.broadcast %149 : vector<8x1xf32> to vector<8x8xf32>
    %151 = vector.broadcast %143 : vector<1x8xf32> to vector<8x8xf32>
    %152 = arith.mulf %150, %151 : vector<8x8xf32>
    %153 = arith.subf %130, %152 : vector<8x8xf32>
    %154 = vector.broadcast %149 : vector<8x1xf32> to vector<8x32xf32>
    %155 = vector.broadcast %146 : vector<1x32xf32> to vector<8x32xf32>
    %156 = arith.mulf %154, %155 : vector<8x32xf32>
    %157 = arith.subf %134, %156 : vector<8x32xf32>
    %158 = vector.extract_strided_slice %153 {offsets = [6, 6], sizes = [1, 1], strides = [1, 1]} : vector<8x8xf32> to vector<1x1xf32>
    %159 = tpu.reciprocal %158 {approx = true} : vector<1x1xf32> -> vector<1x1xf32>
    %160 = arith.mulf %158, %159 : vector<1x1xf32>
    %cst_18 = arith.constant 2.000000e+00 : f32
    %161 = vector.broadcast %cst_18 : f32 to vector<1x1xf32>
    %162 = arith.subf %161, %160 : vector<1x1xf32>
    %163 = arith.mulf %159, %162 : vector<1x1xf32>
    %164 = vector.extract_strided_slice %153 {offsets = [6, 0], sizes = [1, 8], strides = [1, 1]} : vector<8x8xf32> to vector<1x8xf32>
    %165 = vector.broadcast %163 : vector<1x1xf32> to vector<1x8xf32>
    %166 = arith.mulf %164, %165 : vector<1x8xf32>
    %167 = vector.extract_strided_slice %157 {offsets = [6, 0], sizes = [1, 32], strides = [1, 1]} : vector<8x32xf32> to vector<1x32xf32>
    %168 = vector.broadcast %163 : vector<1x1xf32> to vector<1x32xf32>
    %169 = arith.mulf %167, %168 : vector<1x32xf32>
    %170 = vector.extract_strided_slice %153 {offsets = [0, 6], sizes = [8, 1], strides = [1, 1]} : vector<8x8xf32> to vector<8x1xf32>
    %171 = vector.extract_strided_slice %12 {offsets = [0, 6], sizes = [8, 1], strides = [1, 1]} : vector<8x8xf32> to vector<8x1xf32>
    %172 = arith.subf %170, %171 : vector<8x1xf32>
    %173 = vector.broadcast %172 : vector<8x1xf32> to vector<8x8xf32>
    %174 = vector.broadcast %166 : vector<1x8xf32> to vector<8x8xf32>
    %175 = arith.mulf %173, %174 : vector<8x8xf32>
    %176 = arith.subf %153, %175 : vector<8x8xf32>
    %177 = vector.broadcast %172 : vector<8x1xf32> to vector<8x32xf32>
    %178 = vector.broadcast %169 : vector<1x32xf32> to vector<8x32xf32>
    %179 = arith.mulf %177, %178 : vector<8x32xf32>
    %180 = arith.subf %157, %179 : vector<8x32xf32>
    %181 = vector.extract_strided_slice %176 {offsets = [7, 7], sizes = [1, 1], strides = [1, 1]} : vector<8x8xf32> to vector<1x1xf32>
    %182 = tpu.reciprocal %181 {approx = true} : vector<1x1xf32> -> vector<1x1xf32>
    %183 = arith.mulf %181, %182 : vector<1x1xf32>
    %cst_19 = arith.constant 2.000000e+00 : f32
    %184 = vector.broadcast %cst_19 : f32 to vector<1x1xf32>
    %185 = arith.subf %184, %183 : vector<1x1xf32>
    %186 = arith.mulf %182, %185 : vector<1x1xf32>
    %187 = vector.extract_strided_slice %180 {offsets = [7, 0], sizes = [1, 32], strides = [1, 1]} : vector<8x32xf32> to vector<1x32xf32>
    %188 = vector.broadcast %186 : vector<1x1xf32> to vector<1x32xf32>
    %189 = arith.mulf %187, %188 : vector<1x32xf32>
    %190 = vector.extract_strided_slice %176 {offsets = [0, 7], sizes = [8, 1], strides = [1, 1]} : vector<8x8xf32> to vector<8x1xf32>
    %191 = vector.extract_strided_slice %12 {offsets = [0, 7], sizes = [8, 1], strides = [1, 1]} : vector<8x8xf32> to vector<8x1xf32>
    %192 = arith.subf %190, %191 : vector<8x1xf32>
    %193 = vector.broadcast %192 : vector<8x1xf32> to vector<8x32xf32>
    %194 = vector.broadcast %189 : vector<1x32xf32> to vector<8x32xf32>
    %195 = arith.mulf %193, %194 : vector<8x32xf32>
    %196 = arith.subf %180, %195 : vector<8x32xf32>
    %cst_20 = arith.constant dense<0.000000e+00> : vector<16x32xf32>
    %197 = tpu.matmul %2, %196, %cst_20 {dimension_numbers = #tpu.dot_dimension_numbers<[1], [0], [0], [1], [0, 0, 1, 1], [], []>} : vector<16x8xf32>, vector<8x32xf32>, vector<16x32xf32> -> vector<16x32xf32>
    %198 = arith.mulf %197, %197 : vector<16x32xf32>
    %cst_21 = arith.constant dense<0.000000e+00> : vector<32xf32>
    %199 = vector.multi_reduction <add>, %198, %cst_21 [0] : vector<16x32xf32> to vector<32xf32>
    %200 = vector.shape_cast %199 : vector<32xf32> to vector<1x32xf32>
    %201 = arith.mulf %0, %196 : vector<8x32xf32>
    %cst_22 = arith.constant dense<0.000000e+00> : vector<32xf32>
    %202 = vector.multi_reduction <add>, %201, %cst_22 [0] : vector<8x32xf32> to vector<32xf32>
    %203 = vector.shape_cast %202 : vector<32xf32> to vector<1x32xf32>
    %cst_23 = arith.constant 9.99999996E-13 : f32
    %204 = vector.broadcast %cst_23 : f32 to vector<1x32xf32>
    %205 = arith.addf %203, %204 : vector<1x32xf32>
    %206 = tpu.reciprocal %205 {approx = true} : vector<1x32xf32> -> vector<1x32xf32>
    %207 = arith.mulf %205, %206 : vector<1x32xf32>
    %cst_24 = arith.constant 2.000000e+00 : f32
    %208 = vector.broadcast %cst_24 : f32 to vector<1x32xf32>
    %209 = arith.subf %208, %207 : vector<1x32xf32>
    %210 = arith.mulf %206, %209 : vector<1x32xf32>
    %211 = arith.mulf %200, %210 : vector<1x32xf32>
    %212 = arith.subf %211, %15 : vector<1x32xf32>
    %213 = vector.broadcast %6 : f32 to vector<1x32xf32>
    %214 = arith.mulf %213, %212 : vector<1x32xf32>
    %215 = arith.addf %15, %214 : vector<1x32xf32>
    %cst_25 = arith.constant dense<0.000000e+00> : vector<1x32xf32>
    %216 = tpu.matmul %215, %3, %cst_25 {dimension_numbers = #tpu.dot_dimension_numbers<[1], [0], [0], [1], [0, 0, 1, 1], [], []>} : vector<1x32xf32>, vector<32x32xf32>, vector<1x32xf32> -> vector<1x32xf32>
    %217 = arith.addf %216, %4 : vector<1x32xf32>
    %218 = arith.negf %217 : vector<1x32xf32>
    %219 = math.exp %218 : vector<1x32xf32>
    %cst_26 = arith.constant 1.000000e+00 : f32
    %220 = vector.broadcast %cst_26 : f32 to vector<1x32xf32>
    %221 = arith.addf %220, %219 : vector<1x32xf32>
    %222 = arith.divf %220, %221 : vector<1x32xf32>
    %223 = arith.mulf %222, %211 : vector<1x32xf32>
    %cst_27 = arith.constant 1.000000e+00 : f32
    %224 = vector.broadcast %cst_27 : f32 to vector<1x32xf32>
    %225 = arith.subf %224, %222 : vector<1x32xf32>
    %226 = arith.mulf %225, %15 : vector<1x32xf32>
    %227 = arith.addf %223, %226 : vector<1x32xf32>
    %228 = vector.broadcast %7 : f32 to vector<1x32xf32>
    %229 = arith.subf %227, %228 : vector<1x32xf32>
    %cst_28 = arith.constant 0.000000e+00 : f32
    %230 = vector.broadcast %cst_28 : f32 to vector<1x32xf32>
    %231 = arith.maximumf %229, %230 : vector<1x32xf32>
    %c0_29 = arith.constant 0 : index
    %c0_30 = arith.constant 0 : index
    %232 = vector.load %arg7[%c0_29, %c0_30] : memref<1x32xf32, #tpu.memory_space<vmem>>, vector<1x32xf32>
    tpu.vector_store %arg7[%c0_29, %c0_30], %231 {strides = array<i32>} : memref<1x32xf32, #tpu.memory_space<vmem>>, vector<1x32xf32>,
    return
  }
}

</mosaic_0001>

<llo_original>
// kernel: liaa_iaa_forward.1
$region0: #{liaa_iaa_forward.1}
  #allocation0 [shape = 'u32[]', space=smem, size = 0x4, offset = 0x4, fixed_abs, tag = 'smem constant byte address 0x4 - core index']
  #allocation1 [shape = 'u32[144,128]{1,0:T(1,128)}', space=vmem, size = 0x12000, scoped, tag = 'internal scratch']
  %s0 = inlined_call_operand.vmem [shape: f32[8,32], index: 0, kind: input, shape index: {}]
  %s1 = inlined_call_operand.vmem [shape: f32[32,8], index: 1, kind: input, shape index: {}]
  %s2 = inlined_call_operand.vmem [shape: f32[16,8], index: 2, kind: input, shape index: {}]
  %s3 = inlined_call_operand.vmem [shape: f32[32,32], index: 3, kind: input, shape index: {}]
  %s4 = inlined_call_operand.vmem [shape: f32[1,32], index: 4, kind: input, shape index: {}]
  %s5 = inlined_call_operand.vmem [shape: f32[1,32], index: 5, kind: input, shape index: {}]
  %s6 = inlined_call_operand.vmem [shape: f32[3], index: 6, kind: input, shape index: {}]
  %s7 = inlined_call_operand.hbm [shape: f32[1,32], index: 7, kind: output, shape index: {}]
  %s8 = sld [smem:[#allocation0]]
  $region42: #{liaa_iaa_forward.1} parent=0
    _
  %s10 = ssub.s32 1, %s8
  %s11 = scalar_select 0, %s10, %s8
  $region1: #{liaa_iaa_forward.1} parent=0
    #allocation2 [shape = 'u8[512]{0}', space=smem, size = 0x200, scoped, tag = 'input window, operand 6, single buffered']
    #allocation3 [shape = 's32[1]{0}', space=sflag, size = 0x4, scoped, tag = 'scoped memory for liaa_iaa_forward.1']
    #allocation4 [shape = 's32[1]{0}', space=sflag, size = 0x4, scoped, tag = 'scoped memory for liaa_iaa_forward.1']
    #allocation5 [shape = 'u8[512]{0}', space=vmem, size = 0x400, scoped, tag = 'output window, operand 0, single buffered']
    %12 = vsyncpa [#allocation4], 0
    %13 = vsyncpa [#allocation3], 0
    // Predicated region
    $region2: #{liaa_iaa_forward.1} parent=1 // pred_check
      _
    $region3: #{liaa_iaa_forward.1} parent=1 // pred_check_branch
      %15 = sbr.rel (0) target = $region5
    $region4: #{liaa_iaa_forward.1} parent=1 // pred_region
      _
    $region5: #{liaa_iaa_forward.1} parent=1 // pred_fallthru
      _
    // Predicated region
    $region6: #{liaa_iaa_forward.1} parent=1 // pred_check
      _
    $region7: #{liaa_iaa_forward.1} parent=1 // pred_check_branch
      %17 = sbr.rel (0) target = $region9
    $region8: #{liaa_iaa_forward.1} parent=1 // pred_region
      _
    $region9: #{liaa_iaa_forward.1} parent=1 // pred_fallthru
      _
    // Predicated region
    $region10: #{liaa_iaa_forward.1} parent=1 // pred_check
      _
    $region11: #{liaa_iaa_forward.1} parent=1 // pred_check_branch
      %19 = sbr.rel (0) target = $region13
    $region12: #{liaa_iaa_forward.1} parent=1 // pred_region
      _
    $region13: #{liaa_iaa_forward.1} parent=1 // pred_fallthru
      _
    // Predicated region
    $region14: #{liaa_iaa_forward.1} parent=1 // pred_check
      _
    $region15: #{liaa_iaa_forward.1} parent=1 // pred_check_branch
      %21 = sbr.rel (0) target = $region17
    $region16: #{liaa_iaa_forward.1} parent=1 // pred_region
      _
    $region17: #{liaa_iaa_forward.1} parent=1 // pred_fallthru
      _
    // Predicated region
    $region18: #{liaa_iaa_forward.1} parent=1 // pred_check
      _
    $region19: #{liaa_iaa_forward.1} parent=1 // pred_check_branch
      %23 = sbr.rel (0) target = $region21
    $region20: #{liaa_iaa_forward.1} parent=1 // pred_region
      _
    $region21: #{liaa_iaa_forward.1} parent=1 // pred_fallthru
      _
    // Predicated region
    $region22: #{liaa_iaa_forward.1} parent=1 // pred_check
      _
    $region23: #{liaa_iaa_forward.1} parent=1 // pred_check_branch
      %25 = sbr.rel (0) target = $region25
    $region24: #{liaa_iaa_forward.1} parent=1 // pred_region
      _
    $region25: #{liaa_iaa_forward.1} parent=1 // pred_fallthru
      _
    // Predicated region
    $region26: #{liaa_iaa_forward.1} parent=1 // pred_check
      _
    $region27: #{liaa_iaa_forward.1} parent=1 // pred_check_branch
      %27 = sbr.rel (0) target = $region29
    $region28: #{liaa_iaa_forward.1} parent=1 // pred_region
      %s29 = ssub.s32 16, 16
      %30 = vsyncadd [#allocation4], %s29
      %s32 = sshll.u32 %s6, 4
      %s33 = int_to_ptr.vmem [resolvable:$true] %s32
      %35 = dma.vmem_to_smem %s33, 16, [#allocation2], [#allocation4]
    $region29: #{liaa_iaa_forward.1} parent=1 // pred_fallthru
      _
    // Predicated region
    $region30: #{liaa_iaa_forward.1} parent=1 // pred_check
      _
    $region31: #{liaa_iaa_forward.1} parent=1 // pred_check_branch
      %37 = sbr.rel (0) target = $region33
    $region32: #{liaa_iaa_forward.1} parent=1 // pred_region
      %38 = dma.done [#allocation4], 16
    $region33: #{liaa_iaa_forward.1} parent=1 // pred_fallthru
      _
    %39 = sfence
    %v40 = vld [vmem:[%s0] sm:$0xff]
    %v41 = vld [vmem:[%s1] sm:$0xff]
    %v42 = vld [vmem:[%s1 + $0x8] sm:$0xff]
    %v43 = vld [vmem:[%s1 + $0x10] sm:$0xff]
    %v44 = vld [vmem:[%s1 + $0x18] sm:$0xff]
    %v45 = vld [vmem:[%s2] sm:$0xff]
    %v46 = vld [vmem:[%s2 + $0x8] sm:$0xff]
    %v47 = vld [vmem:[%s3] sm:$0xff]
    %v48 = vld [vmem:[%s3 + $0x8] sm:$0xff]
    %v49 = vld [vmem:[%s3 + $0x10] sm:$0xff]
    %v50 = vld [vmem:[%s3 + $0x18] sm:$0xff]
    %v51 = vld [vmem:[%s4] sm:$0x1]
    %s52 = sld [smem:[#allocation2]]
    %s53 = sld [smem:[#allocation2 + $0x1]]
    %s54 = sld [smem:[#allocation2 + $0x2]]
    %v55 = vlaneseq
    %v56 = vshrl.u32 %v55, 7
    %v57 = vlaneseq
    %v58 = vand.u32 %v57, 127
    %vm59 = vcmp.eq.s32.totalorder %v56, %v58
    %v60 = vsel %vm59, 1, 0
    %v61 = vcvt.s32.f32 %v60
    %v62 = vstv %s52
    %v63 = vmul.f32 %v62, %v61
    %v64 = vld [vmem:[%s5] sm:$0x1]
    %v66 = vlaneseq
    %v67 = vshrl.u32 %v66, 7
    %v68 = vsub.s32 0, %v67
    %v69 = vrot.slane %v64, %v68
    %v71 = vmul.f32 %v40, %v69
    %vm72 = vcmask 261120
    %v74 = vsel %vm72, %v71, 0
    %76 = vmatprep.subr.mxu0 0.0
    %77 = vmatpush1.msra.mxu0 %v41
    %78 = vmatprep.subr.mxu0 0.0
    %79 = vmatpush1.msra.mxu0 %v42
    %80 = vmatprep.subr.mxu0 0.0
    %81 = vmatpush1.msra.mxu0 %v43
    %82 = vmatprep.subr.mxu0 0.0
    %83 = vmatpush1.msra.mxu0 %v44
    %84 = vmatprep.subr.mxu0 0.0
    %85 = vmatpush1.msra.mxu0 0.0
    %86 = vmatprep.subr.mxu0 0.0
    %87 = vmatpush1.msra.mxu0 0.0
    %88 = vmatprep.subr.mxu0 0.0
    %89 = vmatpush1.msra.mxu0 0.0
    %90 = vmatprep.subr.mxu0 0.0
    %91 = vmatpush1.msra.mxu0 0.0
    %92 = vmatprep.subr.mxu0 0.0
    %93 = vmatpush1.msra.mxu0 0.0
    %94 = vmatprep.subr.mxu0 0.0
    %95 = vmatpush1.msra.mxu0 0.0
    %96 = vmatprep.subr.mxu0 0.0
    %97 = vmatpush1.msra.mxu0 0.0
    %98 = vmatprep.subr.mxu0 0.0
    %99 = vmatpush1.msra.mxu0 0.0
    %100 = vmatprep.subr.mxu0 0.0
    %101 = vmatpush1.msra.mxu0 0.0
    %102 = vmatprep.subr.mxu0 0.0
    %103 = vmatpush1.msra.mxu0 0.0
    %104 = vmatprep.subr.mxu0 0.0
    %105 = vmatpush1.msra.mxu0 0.0
    %106 = vmatprep.subr.mxu0 0.0
    %107 = vmatpush1.msra.mxu0 0.0
    %108 = vmatprep.subr.mxu0 0.0
    %109 = vmatpush1.msra.mxu0 0.0
    %110 = vmatprep.subr.mxu0 0.0
    %111 = vmatpush1.msra.mxu0 0.0
    %112 = vmatprep.subr.mxu0 0.0
    %113 = vmatpush1.msra.mxu0 0.0
    %114 = vmatprep.subr.mxu0 0.0
    %115 = vmatpush1.msra.mxu0 0.0
    %116 = vmatprep.subr.mxu0 0.0
    %117 = vmatpush1.msra.mxu0 0.0
    %118 = vmatprep.subr.mxu0 0.0
    %119 = vmatpush1.msra.mxu0 0.0
    %120 = vmatprep.subr.mxu0 0.0
    %121 = vmatpush1.msra.mxu0 0.0
    %122 = vmatprep.subr.mxu0 0.0
    %123 = vmatpush1.msra.mxu0 0.0
    %124 = vmatprep.subr.mxu0 0.0
    %125 = vmatpush1.msra.mxu0 0.0
    %126 = vmatprep.subr.mxu0 0.0
    %127 = vmatpush1.msra.mxu0 0.0
    %128 = vmatprep.subr.mxu0 0.0
    %129 = vmatpush1.msra.mxu0 0.0
    %130 = vmatprep.subr.mxu0 0.0
    %131 = vmatpush1.msra.mxu0 0.0
    %132 = vmatprep.subr.mxu0 0.0
    %133 = vmatpush1.msra.mxu0 0.0
    %134 = vmatprep.subr.mxu0 0.0
    %135 = vmatpush1.msra.mxu0 0.0
    %136 = vmatprep.subr.mxu0 0.0
    %137 = vmatpush1.msra.mxu0 0.0
    %138 = vmatprep.subr.mxu0 0.0
    %139 = vmatpush1.msra.mxu0 0.0
    %140 = vmatprep.mubr.f32.mxu0 0.0
    %141 = vmatmul.mubr.f32.gmra.mrb[0].mxu0 %v74
    %v142 = vpop.f32.mrb[0].mxu0
    %v143 = vadd.f32 %v63, %v142
    %v144 = vpop.f32.mrb[0].mxu0
    %145 = vdwg.mxu0
    %v146 = vrcp.pop %v143
    %v147 = vmul.f32 %v143, %v146
    %v148 = vsub.f32 2.0, %v147
    %v149 = vmul.f32 %v146, %v148
    %151 = vset.pattern.permute.xlu0 0
    %152 = vperm.xlu0 %151, %v149
    %v153 = vpop.permute.xlu0 %152
    %v155 = vmul.f32 %v143, %v153
    %v156 = vmul.f32 %v40, %v153
    %v157 = vsub.f32 %v143, %v61
    %159 = vset.pattern.permute.xlu0 0
    %160 = vperm.xlu0 %159, %v157
    %v161 = vpop.permute.xlu0 %160
    %v163 = vlaneseq
    %v164 = vshrl.u32 %v163, 7
    %v165 = vsub.s32 0, %v164
    %v166 = vrot.slane %v155, %v165
    %v167 = vmul.f32 %v161, %v166
    %v168 = vsub.f32 %v143, %v167
    %v169 = vlaneseq
    %v170 = vshrl.u32 %v169, 7
    %v171 = vsub.s32 0, %v170
    %v172 = vrot.slane %v156, %v171
    %v173 = vmul.f32 %v161, %v172
    %v174 = vsub.f32 %v40, %v173
    %v175 = vrcp.pop %v168
    %v176 = vmul.f32 %v168, %v175
    %v177 = vsub.f32 2.0, %v176
    %v178 = vmul.f32 %v175, %v177
    %180 = vset.pattern.permute.xlu0 1
    %181 = vperm.xlu0 %180, %v178
    %v182 = vpop.permute.xlu0 %181
    %v184 = vmul.f32 %v168, %v182
    %v185 = vmul.f32 %v174, %v182
    %v186 = vsub.f32 %v168, %v61
    %188 = vset.pattern.permute.xlu0 1
    %189 = vperm.xlu0 %188, %v186
    %v190 = vpop.permute.xlu0 %189
    %v192 = vlaneseq
    %v193 = vshrl.u32 %v192, 7
    %v194 = vsub.s32 1, %v193
    %v195 = vrot.slane %v184, %v194
    %v196 = vmul.f32 %v190, %v195
    %v197 = vsub.f32 %v168, %v196
    %v198 = vlaneseq
    %v199 = vshrl.u32 %v198, 7
    %v200 = vsub.s32 1, %v199
    %v201 = vrot.slane %v185, %v200
    %v202 = vmul.f32 %v190, %v201
    %v203 = vsub.f32 %v174, %v202
    %v204 = vrcp.pop %v197
    %v205 = vmul.f32 %v197, %v204
    %v206 = vsub.f32 2.0, %v205
    %v207 = vmul.f32 %v204, %v206
    %209 = vset.pattern.permute.xlu0 2
    %210 = vperm.xlu0 %209, %v207
    %v211 = vpop.permute.xlu0 %210
    %v213 = vmul.f32 %v197, %v211
    %v214 = vmul.f32 %v203, %v211
    %v215 = vsub.f32 %v197, %v61
    %217 = vset.pattern.permute.xlu0 2
    %218 = vperm.xlu0 %217, %v215
    %v219 = vpop.permute.xlu0 %218
    %v221 = vlaneseq
    %v222 = vshrl.u32 %v221, 7
    %v223 = vsub.s32 2, %v222
    %v224 = vrot.slane %v213, %v223
    %v225 = vmul.f32 %v219, %v224
    %v226 = vsub.f32 %v197, %v225
    %v227 = vlaneseq
    %v228 = vshrl.u32 %v227, 7
    %v229 = vsub.s32 2, %v228
    %v230 = vrot.slane %v214, %v229
    %v231 = vmul.f32 %v219, %v230
    %v232 = vsub.f32 %v203, %v231
    %v233 = vrcp.pop %v226
    %v234 = vmul.f32 %v226, %v233
    %v235 = vsub.f32 2.0, %v234
    %v236 = vmul.f32 %v233, %v235
    %238 = vset.pattern.permute.xlu0 3
    %239 = vperm.xlu0 %238, %v236
    %v240 = vpop.permute.xlu0 %239
    %v242 = vmul.f32 %v226, %v240
    %v243 = vmul.f32 %v232, %v240
    %v244 = vsub.f32 %v226, %v61
    %246 = vset.pattern.permute.xlu0 3
    %247 = vperm.xlu0 %246, %v244
    %v248 = vpop.permute.xlu0 %247
    %v250 = vlaneseq
    %v251 = vshrl.u32 %v250, 7
    %v252 = vsub.s32 3, %v251
    %v253 = vrot.slane %v242, %v252
    %v254 = vmul.f32 %v248, %v253
    %v255 = vsub.f32 %v226, %v254
    %v256 = vlaneseq
    %v257 = vshrl.u32 %v256, 7
    %v258 = vsub.s32 3, %v257
    %v259 = vrot.slane %v243, %v258
    %v260 = vmul.f32 %v248, %v259
    %v261 = vsub.f32 %v232, %v260
    %v262 = vrcp.pop %v255
    %v263 = vmul.f32 %v255, %v262
    %v264 = vsub.f32 2.0, %v263
    %v265 = vmul.f32 %v262, %v264
    %267 = vset.pattern.permute.xlu0 4
    %268 = vperm.xlu0 %267, %v265
    %v269 = vpop.permute.xlu0 %268
    %v271 = vmul.f32 %v255, %v269
    %v272 = vmul.f32 %v261, %v269
    %v273 = vsub.f32 %v255, %v61
    %275 = vset.pattern.permute.xlu0 4
    %276 = vperm.xlu0 %275, %v273
    %v277 = vpop.permute.xlu0 %276
    %v279 = vlaneseq
    %v280 = vshrl.u32 %v279, 7
    %v281 = vsub.s32 4, %v280
    %v282 = vrot.slane %v271, %v281
    %v283 = vmul.f32 %v277, %v282
    %v284 = vsub.f32 %v255, %v283
    %v285 = vlaneseq
    %v286 = vshrl.u32 %v285, 7
    %v287 = vsub.s32 4, %v286
    %v288 = vrot.slane %v272, %v287
    %v289 = vmul.f32 %v277, %v288
    %v290 = vsub.f32 %v261, %v289
    %v291 = vrcp.pop %v284
    %v292 = vmul.f32 %v284, %v291
    %v293 = vsub.f32 2.0, %v292
    %v294 = vmul.f32 %v291, %v293
    %296 = vset.pattern.permute.xlu0 5
    %297 = vperm.xlu0 %296, %v294
    %v298 = vpop.permute.xlu0 %297
    %v300 = vmul.f32 %v284, %v298
    %v301 = vmul.f32 %v290, %v298
    %v302 = vsub.f32 %v284, %v61
    %304 = vset.pattern.permute.xlu0 5
    %305 = vperm.xlu0 %304, %v302
    %v306 = vpop.permute.xlu0 %305
    %v308 = vlaneseq
    %v309 = vshrl.u32 %v308, 7
    %v310 = vsub.s32 5, %v309
    %v311 = vrot.slane %v300, %v310
    %v312 = vmul.f32 %v306, %v311
    %v313 = vsub.f32 %v284, %v312
    %v314 = vlaneseq
    %v315 = vshrl.u32 %v314, 7
    %v316 = vsub.s32 5, %v315
    %v317 = vrot.slane %v301, %v316
    %v318 = vmul.f32 %v306, %v317
    %v319 = vsub.f32 %v290, %v318
    %v320 = vrcp.pop %v313
    %v321 = vmul.f32 %v313, %v320
    %v322 = vsub.f32 2.0, %v321
    %v323 = vmul.f32 %v320, %v322
    %325 = vset.pattern.permute.xlu0 6
    %326 = vperm.xlu0 %325, %v323
    %v327 = vpop.permute.xlu0 %326
    %v329 = vmul.f32 %v313, %v327
    %v330 = vmul.f32 %v319, %v327
    %v331 = vsub.f32 %v313, %v61
    %333 = vset.pattern.permute.xlu0 6
    %334 = vperm.xlu0 %333, %v331
    %v335 = vpop.permute.xlu0 %334
    %v337 = vlaneseq
    %v338 = vshrl.u32 %v337, 7
    %v339 = vsub.s32 6, %v338
    %v340 = vrot.slane %v329, %v339
    %v341 = vmul.f32 %v335, %v340
    %v342 = vsub.f32 %v313, %v341
    %v343 = vlaneseq
    %v344 = vshrl.u32 %v343, 7
    %v345 = vsub.s32 6, %v344
    %v346 = vrot.slane %v330, %v345
    %v347 = vmul.f32 %v335, %v346
    %v348 = vsub.f32 %v319, %v347
    %v349 = vrcp.pop %v342
    %v350 = vmul.f32 %v342, %v349
    %v351 = vsub.f32 2.0, %v350
    %v352 = vmul.f32 %v349, %v351
    %354 = vset.pattern.permute.xlu0 7
    %355 = vperm.xlu0 %354, %v352
    %v356 = vpop.permute.xlu0 %355
    %v358 = vmul.f32 %v348, %v356
    %v359 = vsub.f32 %v342, %v61
    %361 = vset.pattern.permute.xlu0 7
    %362 = vperm.xlu0 %361, %v359
    %v363 = vpop.permute.xlu0 %362
    %v365 = vlaneseq
    %v366 = vshrl.u32 %v365, 7
    %v367 = vsub.s32 7, %v366
    %v368 = vrot.slane %v358, %v367
    %v369 = vmul.f32 %v363, %v368
    %v370 = vsub.f32 %v348, %v369
    %vm371 = vcmask 64512
    %v373 = vsel %vm371, %v45, 0
    %v376 = vsel %vm371, %v46, 0
    %378 = vmatprep.subr.mxu0 0.0
    %379 = vmatpush1.msra.mxu0 %v370
    %380 = vmatprep.subr.mxu0 0.0
    %381 = vmatpush1.msra.mxu0 0.0
    %382 = vmatprep.subr.mxu0 0.0
    %383 = vmatpush1.msra.mxu0 0.0
    %384 = vmatprep.subr.mxu0 0.0
    %385 = vmatpush1.msra.mxu0 0.0
    %386 = vmatprep.subr.mxu0 0.0
    %387 = vmatpush1.msra.mxu0 0.0
    %388 = vmatprep.subr.mxu0 0.0
    %389 = vmatpush1.msra.mxu0 0.0
    %390 = vmatprep.subr.mxu0 0.0
    %391 = vmatpush1.msra.mxu0 0.0
    %392 = vmatprep.subr.mxu0 0.0
    %393 = vmatpush1.msra.mxu0 0.0
    %394 = vmatprep.subr.mxu0 0.0
    %395 = vmatpush1.msra.mxu0 0.0
    %396 = vmatprep.subr.mxu0 0.0
    %397 = vmatpush1.msra.mxu0 0.0
    %398 = vmatprep.subr.mxu0 0.0
    %399 = vmatpush1.msra.mxu0 0.0
    %400 = vmatprep.subr.mxu0 0.0
    %401 = vmatpush1.msra.mxu0 0.0
    %402 = vmatprep.subr.mxu0 0.0
    %403 = vmatpush1.msra.mxu0 0.0
    %404 = vmatprep.subr.mxu0 0.0
    %405 = vmatpush1.msra.mxu0 0.0
    %406 = vmatprep.subr.mxu0 0.0
    %407 = vmatpush1.msra.mxu0 0.0
    %408 = vmatprep.subr.mxu0 0.0
    %409 = vmatpush1.msra.mxu0 0.0
    %410 = vmatprep.subr.mxu0 0.0
    %411 = vmatpush1.msra.mxu0 0.0
    %412 = vmatprep.subr.mxu0 0.0
    %413 = vmatpush1.msra.mxu0 0.0
    %414 = vmatprep.subr.mxu0 0.0
    %415 = vmatpush1.msra.mxu0 0.0
    %416 = vmatprep.subr.mxu0 0.0
    %417 = vmatpush1.msra.mxu0 0.0
    %418 = vmatprep.subr.mxu0 0.0
    %419 = vmatpush1.msra.mxu0 0.0
    %420 = vmatprep.subr.mxu0 0.0
    %421 = vmatpush1.msra.mxu0 0.0
    %422 = vmatprep.subr.mxu0 0.0
    %423 = vmatpush1.msra.mxu0 0.0
    %424 = vmatprep.subr.mxu0 0.0
    %425 = vmatpush1.msra.mxu0 0.0
    %426 = vmatprep.subr.mxu0 0.0
    %427 = vmatpush1.msra.mxu0 0.0
    %428 = vmatprep.subr.mxu0 0.0
    %429 = vmatpush1.msra.mxu0 0.0
    %430 = vmatprep.subr.mxu0 0.0
    %431 = vmatpush1.msra.mxu0 0.0
    %432 = vmatprep.subr.mxu0 0.0
    %433 = vmatpush1.msra.mxu0 0.0
    %434 = vmatprep.subr.mxu0 0.0
    %435 = vmatpush1.msra.mxu0 0.0
    %436 = vmatprep.subr.mxu0 0.0
    %437 = vmatpush1.msra.mxu0 0.0
    %438 = vmatprep.subr.mxu0 0.0
    %439 = vmatpush1.msra.mxu0 0.0
    %440 = vmatprep.subr.mxu0 0.0
    %441 = vmatpush1.msra.mxu0 0.0
    %442 = vmatprep.mubr.f32.mxu0 0.0
    %443 = vmatmul.mubr.f32.gmra.mrb[0].mxu0 %v373
    %v444 = vpop.f32.mrb[0].mxu0
    %v445 = vadd.f32 0.0, %v444
    %v446 = vpop.f32.mrb[0].mxu0
    %447 = vmatprep.mubr.f32.mxu0 0.0
    %448 = vmatmul.mubr.f32.gmra.mrb[0].mxu0 %v376
    %v449 = vpop.f32.mrb[0].mxu0
    %v450 = vadd.f32 0.0, %v449
    %v451 = vpop.f32.mrb[0].mxu0
    %452 = vdwg.mxu0
    %v453 = vmul.f32 %v445, %v445
    %v454 = vmul.f32 %v450, %v450
    %v455 = vsel %vm72, %v453, 0.0
    %v456 = vsel %vm72, %v454, 0.0
    %v457 = vadd.f32 %v455, %v456
    %v458 = vrot.slane %v457, 4
    %v459 = vadd.f32 %v457, %v458
    %v460 = vrot.slane %v459, 2
    %v461 = vadd.f32 %v459, %v460
    %v462 = vrot.slane %v461, 1
    %v463 = vadd.f32 %v461, %v462
    %v464 = vmul.f32 %v40, %v370
    %v465 = vsel %vm72, %v464, 0.0
    %v466 = vrot.slane %v465, 4
    %v467 = vadd.f32 %v465, %v466
    %v468 = vrot.slane %v467, 2
    %v469 = vadd.f32 %v467, %v468
    %v470 = vrot.slane %v469, 1
    %v471 = vadd.f32 %v469, %v470
    %v472 = vadd.f32 %v471, 1e-12
    %v473 = vrcp.pop %v472
    %v474 = vmul.f32 %v472, %v473
    %v475 = vsub.f32 2.0, %v474
    %v476 = vmul.f32 %v473, %v475
    %v477 = vmul.f32 %v463, %v476
    %v478 = vsub.f32 %v477, %v64
    %v479 = vstv %s53
    %v480 = vmul.f32 %v479, %v478
    %v481 = vadd.f32 %v64, %v480
    %v483 = vsel %vm72, %v481, 0
    %485 = vmatprep.subr.mxu0 0.0
    %486 = vmatpush1.msra.mxu0 %v47
    %487 = vmatprep.subr.mxu0 0.0
    %488 = vmatpush1.msra.mxu0 %v48
    %489 = vmatprep.subr.mxu0 0.0
    %490 = vmatpush1.msra.mxu0 %v49
    %491 = vmatprep.subr.mxu0 0.0
    %492 = vmatpush1.msra.mxu0 %v50
    %493 = vmatprep.subr.mxu0 0.0
    %494 = vmatpush1.msra.mxu0 0.0
    %495 = vmatprep.subr.mxu0 0.0
    %496 = vmatpush1.msra.mxu0 0.0
    %497 = vmatprep.subr.mxu0 0.0
    %498 = vmatpush1.msra.mxu0 0.0
    %499 = vmatprep.subr.mxu0 0.0
    %500 = vmatpush1.msra.mxu0 0.0
    %501 = vmatprep.subr.mxu0 0.0
    %502 = vmatpush1.msra.mxu0 0.0
    %503 = vmatprep.subr.mxu0 0.0
    %504 = vmatpush1.msra.mxu0 0.0
    %505 = vmatprep.subr.mxu0 0.0
    %506 = vmatpush1.msra.mxu0 0.0
    %507 = vmatprep.subr.mxu0 0.0
    %508 = vmatpush1.msra.mxu0 0.0
    %509 = vmatprep.subr.mxu0 0.0
    %510 = vmatpush1.msra.mxu0 0.0
    %511 = vmatprep.subr.mxu0 0.0
    %512 = vmatpush1.msra.mxu0 0.0
    %513 = vmatprep.subr.mxu0 0.0
    %514 = vmatpush1.msra.mxu0 0.0
    %515 = vmatprep.subr.mxu0 0.0
    %516 = vmatpush1.msra.mxu0 0.0
    %517 = vmatprep.subr.mxu0 0.0
    %518 = vmatpush1.msra.mxu0 0.0
    %519 = vmatprep.subr.mxu0 0.0
    %520 = vmatpush1.msra.mxu0 0.0
    %521 = vmatprep.subr.mxu0 0.0
    %522 = vmatpush1.msra.mxu0 0.0
    %523 = vmatprep.subr.mxu0 0.0
    %524 = vmatpush1.msra.mxu0 0.0
    %525 = vmatprep.subr.mxu0 0.0
    %526 = vmatpush1.msra.mxu0 0.0
    %527 = vmatprep.subr.mxu0 0.0
    %528 = vmatpush1.msra.mxu0 0.0
    %529 = vmatprep.subr.mxu0 0.0
    %530 = vmatpush1.msra.mxu0 0.0
    %531 = vmatprep.subr.mxu0 0.0
    %532 = vmatpush1.msra.mxu0 0.0
    %533 = vmatprep.subr.mxu0 0.0
    %534 = vmatpush1.msra.mxu0 0.0
    %535 = vmatprep.subr.mxu0 0.0
    %536 = vmatpush1.msra.mxu0 0.0
    %537 = vmatprep.subr.mxu0 0.0
    %538 = vmatpush1.msra.mxu0 0.0
    %539 = vmatprep.subr.mxu0 0.0
    %540 = vmatpush1.msra.mxu0 0.0
    %541 = vmatprep.subr.mxu0 0.0
    %542 = vmatpush1.msra.mxu0 0.0
    %543 = vmatprep.subr.mxu0 0.0
    %544 = vmatpush1.msra.mxu0 0.0
    %545 = vmatprep.subr.mxu0 0.0
    %546 = vmatpush1.msra.mxu0 0.0
    %547 = vmatprep.subr.mxu0 0.0
    %548 = vmatpush1.msra.mxu0 0.0
    %549 = vmatprep.mubr.f32.mxu0 0.0
    %550 = vmatmul.mubr.f32.gmra.mrb[0].mxu0 %v483
    %v551 = vpop.f32.mrb[0].mxu0
    %v552 = vadd.f32 %v51, %v551
    %v553 = vpop.f32.mrb[0].mxu0
    %554 = vdwg.mxu0
    %v555 = vxor.u32 %v552, 2147483648
    %v556 = vmul.f32 %v555, 1.442695
    %v557 = vpow.pop %v556
    %v558 = vadd.f32 %v557, 1.0
    %v559 = vrcp.pop %v558
    %v560 = vmul.f32 1.0, %v559
    %v561 = vmul.f32 %v560, %v477
    %v562 = vsub.f32 1.0, %v560
    %v563 = vmul.f32 %v562, %v64
    %v564 = vadd.f32 %v561, %v563
    %v565 = vstv %s54
    %v566 = vsub.f32 %v564, %v565
    %v567 = vmax.f32 %v566, 0.0
    %vm568 = vcmask 253952
    %569 = vst.msk [vmem:[#allocation5] sm:$0x1] %vm568, %v567
    // Predicated region
    $region34: #{liaa_iaa_forward.1} parent=1 // pred_check
      _
    $region35: #{liaa_iaa_forward.1} parent=1 // pred_check_branch
      %571 = sbr.rel (0) target = $region37
    $region36: #{liaa_iaa_forward.1} parent=1 // pred_region
      %s573 = ssub.s32 16, 16
      %574 = vsyncadd [#allocation3], %s573
      %s576 = sshll.u32 [#allocation5], 4
      %s577 = int_to_ptr.vmem [resolvable:$true] %s576
      %579 = dma.vmem_to_hbm [thread:$0]  %s577, 16, %s7, [#allocation3]
    $region37: #{liaa_iaa_forward.1} parent=1 // pred_fallthru
      _
    // Predicated region
    $region38: #{liaa_iaa_forward.1} parent=1 // pred_check
      _
    $region39: #{liaa_iaa_forward.1} parent=1 // pred_check_branch
      %581 = sbr.rel (0) target = $region41
    $region40: #{liaa_iaa_forward.1} parent=1 // pred_region
      %582 = dma.done [#allocation3], 16
    $region41: #{liaa_iaa_forward.1} parent=1 // pred_fallthru
      _
    %583 = vsyncpa [#allocation3], 1
    %584 = vsyncpa [#allocation4], 1

</llo_original>
